<compile_context>
chip_gen: v6e
topology: v6e:2x2x1
jax: 0.10.0
libtpu: 0.0.40
codegen_flags: <defaults>
</compile_context>

<pallas_src>
import functools

import jax
import jax.numpy as jnp
from jax.experimental import pallas as pl
from jax.experimental.pallas import tpu as pltpu

LN_EPS = 1e-5


def _round_up(x, m):
    return ((x + m - 1) // m) * m


def _apply_activation(y, activation):
    if activation == "relu":
        return jnp.maximum(y, 0.0)
    if activation == "gelu":
        return jax.nn.gelu(y, approximate=False)   # matches nn.GELU default
    if activation == "tanh":
        return jnp.tanh(y)
    raise ValueError(f"unknown activation {activation!r}")


# --------------------------------------------------------------------------
# Fused FClayer kernel: y = LayerNorm(act(x @ W + b))   (Dropout = identity)
# --------------------------------------------------------------------------
def _fclayer_kernel(x_ref, w_ref, b_ref, *rest, activation, use_norm, n_out_real):
    if use_norm:
        gamma_ref, beta_ref, o_ref = rest
    else:
        (o_ref,) = rest

    # Operands go to the MXU in their native dtype; accumulate in f32.
    y = jnp.dot(x_ref[...], w_ref[...], preferred_element_type=jnp.float32)
    y = y + b_ref[...].astype(jnp.float32)
    y = _apply_activation(y, activation)

    if use_norm:
        n_out_p = y.shape[-1]
        if n_out_p == n_out_real:
            mean = jnp.mean(y, axis=-1, keepdims=True)
            c = y - mean
            var = jnp.mean(c * c, axis=-1, keepdims=True)
        else:
            # Feature dim is zero-padded to a lane multiple; mask the LN stats
            # so they only cover the real n_out columns.
            mask = (jax.lax.broadcasted_iota(jnp.int32, (1, n_out_p), 1)
                    < n_out_real).astype(jnp.float32)
            inv_n = 1.0 / float(n_out_real)
            mean = jnp.sum(y * mask, axis=-1, keepdims=True) * inv_n
            c = y - mean
            var = jnp.sum((c * c) * mask, axis=-1, keepdims=True) * inv_n
        y = c * jax.lax.rsqrt(var + LN_EPS)
        y = y * gamma_ref[...].astype(jnp.float32) + beta_ref[...].astype(jnp.float32)

    # TODO(synk): training-mode Dropout (pltpu.prng_seed / prng_random_bits mask)
    # is not implemented; eval-mode identity semantics only.
    o_ref[...] = y.astype(o_ref.dtype)


def fused_fclayer(x, w, b, gamma=None, beta=None, *, activation="relu",
                  use_norm=True, tm_max=256, out_dtype=None):
    """x: (B, n_in); w: PyTorch layout (n_out, n_in); returns (B, n_out)."""
    B, n_in = x.shape
    n_out = w.shape[0]
    out_dtype = out_dtype or x.dtype

    # Lane-dense feature padding (multiples of 128) -> unmasked vector stores.
    n_in_p = _round_up(n_in, 128)
    n_out_p = _round_up(n_out, 128)

    # Batch tile: whole (padded) batch when small; capped at 256 rows so that
    # large batches still produce >= 2 parallel grid steps (v7x megacore).
    tm = min(tm_max, _round_up(B, 8))
    B_p = _round_up(B, tm)

    w_t = jnp.transpose(w)                                     # (n_in, n_out)
    x_p = jnp.pad(x, ((0, B_p - B), (0, n_in_p - n_in)))
    w_p = jnp.pad(w_t, ((0, n_in_p - n_in), (0, n_out_p - n_out)))
    b_p = jnp.pad(b.reshape(1, n_out), ((0, 0), (0, n_out_p - n_out)))

    ins = [x_p, w_p, b_p]
    in_specs = [
        pl.BlockSpec((tm, n_in_p), lambda i: (i, 0)),
        pl.BlockSpec((n_in_p, n_out_p), lambda i: (0, 0)),
        pl.BlockSpec((1, n_out_p), lambda i: (0, 0)),
    ]
    if use_norm:
        g_p = jnp.pad(gamma.reshape(1, n_out), ((0, 0), (0, n_out_p - n_out)),
                      constant_values=1.0)
        be_p = jnp.pad(beta.reshape(1, n_out), ((0, 0), (0, n_out_p - n_out)))
        ins += [g_p, be_p]
        in_specs += [pl.BlockSpec((1, n_out_p), lambda i: (0, 0)),
                     pl.BlockSpec((1, n_out_p), lambda i: (0, 0))]

    kernel = functools.partial(_fclayer_kernel, activation=activation,
                               use_norm=use_norm, n_out_real=n_out)

    cost = pl.CostEstimate(
        flops=2 * B_p * n_in_p * n_out_p,
        transcendentals=B_p if use_norm else 0,
        bytes_accessed=4 * (B_p * n_in_p + n_in_p * n_out_p + B_p * n_out_p),
    )

    out = pl.pallas_call(
        kernel,
        out_shape=jax.ShapeDtypeStruct((B_p, n_out_p), out_dtype),
        grid_spec=pltpu.PrefetchScalarGridSpec(
            num_scalar_prefetch=0,
            grid=(B_p // tm,),
            in_specs=in_specs,
            out_specs=pl.BlockSpec((tm, n_out_p), lambda i: (i, 0)),
        ),
        compiler_params=pltpu.CompilerParams(
            dimension_semantics=("parallel",),
            vmem_limit_bytes=48 * 1024 * 1024,
        ),
        cost_estimate=cost,
    )(*ins)
    return out[:B, :n_out]


# --------------------------------------------------------------------------
# DotProductor kernel: relu(z_bulk[:, None, :] * z_ref[None, :, :])
# --------------------------------------------------------------------------
def _dot_productor_kernel(bulk_ref, ref_ref, o_ref):
    b = bulk_ref[...]                              # (B, D)
    for j in range(o_ref.shape[0]):                # n_labels (small, static)
        rj = ref_ref[j:j + 1, :]                   # (1, D)
        o_ref[j] = jnp.maximum(b * rj, 0.0).astype(o_ref.dtype)


def dot_productor_relu_pallas(z_bulk, z_ref):
    B, D = z_bulk.shape
    L = z_ref.shape[0]
    out = pl.pallas_call(
        _dot_productor_kernel,
        out_shape=jax.ShapeDtypeStruct((L, B, D), z_bulk.dtype),
        grid_spec=pltpu.PrefetchScalarGridSpec(
            num_scalar_prefetch=0,
            grid=(1,),
            in_specs=[pl.BlockSpec((B, D), lambda i: (0, 0)),
                      pl.BlockSpec((L, D), lambda i: (0, 0))],
            out_specs=pl.BlockSpec((L, B, D), lambda i: (0, 0, 0)),
        ),
    )(z_bulk, z_ref)
    return jnp.transpose(out, (1, 0, 2))           # (B, L, D)


def dot_productor_relu_ref(z_bulk, z_ref):
    return jnp.maximum(z_bulk[:, None, :] * z_ref[None, :, :], 0.0)


# --------------------------------------------------------------------------
# Multiplier: relu(z_bulk @ z_ref.T) — reuses the fused FC kernel (no bias/norm)
# --------------------------------------------------------------------------
def multiplier_relu_pallas(z_bulk, z_ref):
    zero_b = jnp.zeros((z_ref.shape[0],), z_bulk.dtype)
    return fused_fclayer(z_bulk, z_ref, zero_b, activation="relu", use_norm=False)


def multiplier_relu_ref(z_bulk, z_ref):
    return jnp.maximum(z_bulk @ z_ref.T, 0.0)


# --------------------------------------------------------------------------
# Parameter init (kaiming-normal weights, bias = 0.01, LN defaults) + forward
# --------------------------------------------------------------------------
def init_fclayer(key, n_in, n_out, activation, use_norm):
    w = jax.random.normal(key, (n_out, n_in), jnp.float32) * ((2.0 / n_in) ** 0.5)
    b = jnp.full((n_out,), 0.01, jnp.float32)
    p = {"w": w, "b": b, "activation": activation, "use_norm": use_norm}
    if use_norm:
        p["gamma"] = jnp.ones((n_out,), jnp.float32)
        p["beta"] = jnp.zeros((n_out,), jnp.float32)
    return p


def fclayer_pallas(p, x):
    return fused_fclayer(x, p["w"], p["b"], p.get("gamma"), p.get("beta"),
                         activation=p["activation"], use_norm=p["use_norm"])


def fclayer_ref(p, x):
    y = x @ p["w"].T + p["b"]
    y = _apply_activation(y, p["activation"])
    if p["use_norm"]:
        mean = jnp.mean(y, axis=-1, keepdims=True)
        var = jnp.mean((y - mean) ** 2, axis=-1, keepdims=True)
        y = (y - mean) * jax.lax.rsqrt(var + LN_EPS) * p["gamma"] + p["beta"]
    return y


def init_mlp(key, n_in, n_out, n_hidden, activation, norm_last_layer=True):
    dims = list(zip([n_in] + n_hidden, n_hidden + [n_out]))
    keys = jax.random.split(key, len(dims))
    return [init_fclayer(k, ni, no, activation,
                         use_norm=(i < len(dims) - 1) or norm_last_layer)
            for i, ((ni, no), k) in enumerate(zip(dims, keys))]


def mlp_forward(layers, x, fc, multiple_outputs=False):
    outs = []
    for p in layers:
        x = fc(p, x)
        outs.append(x)
    return outs if multiple_outputs else x


def init_resmlp(key, n_in, n_hidden, n_layers, activation):
    return init_mlp(key, n_in, n_hidden, [n_hidden] * n_layers, activation,
                    norm_last_layer=True)


def resmlp_forward(layers, x, fc):
    outs = mlp_forward(layers, x, fc, multiple_outputs=True)
    return outs[0] + outs[-1]


def init_encoder(key, n_in, n_hidden, n_mlp_layers, n_latent, activation):
    dims = list(zip([n_in] + n_hidden, n_hidden + [n_latent]))
    keys = jax.random.split(key, len(dims))
    return [init_resmlp(k, ni, no, n_mlp_layers, activation)
            for (ni, no), k in zip(dims, keys)]


def encoder_forward(blocks, x, fc):           # last_k == 1
    for blk in blocks:
        x = resmlp_forward(blk, x, fc)
    return x


def init_prop_decoder(key, n_labels):
    # PropDecoder(n_in=n_labels, n_hidden=[128,128], activation='relu', dropout=0)
    return init_mlp(key, n_labels, n_labels, [128, 128], "relu",
                    norm_last_layer=False)


def prop_decoder_forward(layers, x, fc):      # last_k == 1
    z = x + mlp_forward(layers, x, fc)
    return z / jnp.sum(z, axis=1, keepdims=True)


def init_expr_decoder(key, n_latent, n_hidden, n_genes, activation):
    return init_mlp(key, n_latent, n_genes, n_hidden[::-1], activation,
                    norm_last_layer=False)


def expr_decoder_forward(layers, x, fc):      # x: (B, n_labels, n_latent)
    B, L, D = x.shape
    y = mlp_forward(layers, x.reshape(B * L, D), fc)
    return y.reshape(B, L, -1)


def init_deconv(key, n_labels, n_genes, n_hidden, n_mlp_layers, n_latent,
                activation="relu"):
    k1, k2, k3, k4 = jax.random.split(key, 4)
    return {
        "reference_encoder": init_encoder(k1, n_genes, n_hidden, n_mlp_layers,
                                          n_latent, activation),
        "bulk_encoder": init_encoder(k2, n_genes, n_hidden, n_mlp_layers,
                                     n_latent, activation),
        "proportion_decoder": init_prop_decoder(k3, n_labels),
        "expression_decoder": init_expr_decoder(k4, n_latent, n_hidden,
                                                n_genes, activation),
    }


def deconv_forward(params, bulk, reference, *, use_pallas=True):
    """task='both', last_k=1, eval mode (dropout = identity)."""
    fc = fclayer_pallas if use_pallas else fclayer_ref
    mult = multiplier_relu_pallas if use_pallas else multiplier_relu_ref
    dotp = dot_productor_relu_pallas if use_pallas else dot_productor_relu_ref

    z_ref = encoder_forward(params["reference_encoder"], reference, fc)
    z_bulk = encoder_forward(params["bulk_encoder"], bulk, fc)

    z_prop = mult(z_bulk, z_ref)                         # (B, n_labels)
    prop = prop_decoder_forward(params["proportion_decoder"], z_prop, fc)

    z_expr = dotp(z_bulk, z_ref)                         # (B, n_labels, n_latent)
    expr = expr_decoder_forward(params["expression_decoder"], z_expr, fc)

    return {"prop": prop, "expr": expr}


if __name__ == "__main__":
    # Small Deconv config: 8 bulk samples, 4 cell-type labels, 32 genes,
    # hidden dims [32], 2 MLP layers per ResMLP block, 16-d latent.
    n_labels, n_genes, n_latent = 4, 32, 16
    n_hidden = [32]
    n_mlp_layers = 2
    batch = 8

    key = jax.random.PRNGKey(0)
    k_params, k_bulk, k_ref = jax.random.split(key, 3)

    params = init_deconv(k_params, n_labels, n_genes, n_hidden, n_mlp_layers,
                         n_latent, activation="relu")
    bulk = jax.random.normal(k_bulk, (batch, n_genes), dtype=jnp.float32)
    reference = jax.random.normal(k_ref, (n_labels, n_genes), dtype=jnp.float32)

    out = deconv_forward(params, bulk, reference, use_pallas=True)
    out = jax.block_until_ready(out)

    # Pure-JAX reference of the same forward.
    ref_out = deconv_forward(params, bulk, reference, use_pallas=False)
    ref_out = jax.block_until_ready(ref_out)

    assert out["prop"].shape == (batch, n_labels)
    assert out["expr"].shape == (batch, n_labels, n_genes)
    assert bool(jnp.all(jnp.isfinite(out["prop"])))
    assert bool(jnp.all(jnp.isfinite(out["expr"])))
    assert jnp.allclose(out["prop"], ref_out["prop"], atol=2e-3, rtol=2e-3), \
        "prop mismatch vs reference"
    assert jnp.allclose(out["expr"], ref_out["expr"], atol=2e-3, rtol=2e-3), \
        "expr mismatch vs reference"

    print("KERNEL_OK")
</pallas_src>

<mosaic_0001>
module attributes {stable_mosaic.version = 11 : i64} {
  func.func @_fclayer_kernel(%arg0: i32, %arg1: memref<8x128xf32, #tpu.memory_space<vmem>>, %arg2: memref<128x128xf32, #tpu.memory_space<vmem>>, %arg3: memref<1x128xf32, #tpu.memory_space<vmem>>, %arg4: memref<1x128xf32, #tpu.memory_space<vmem>>, %arg5: memref<1x128xf32, #tpu.memory_space<vmem>>, %arg6: memref<8x128xf32, #tpu.memory_space<vmem>>) attributes {dimension_semantics = [#tpu.dimension_semantics<parallel>], iteration_bounds = array<i64: 1>, scalar_prefetch = 0 : i64, scratch_operands = 0 : i64, tpu.core_type = #tpu.core_type<tc>, window_params = [{transform_indices = @transform_0, window_bounds = array<i64: 8, 128>}, {pipeline_mode = #tpu.pipeline_mode<synchronous>, transform_indices = @transform_1, window_bounds = array<i64: 128, 128>}, {pipeline_mode = #tpu.pipeline_mode<synchronous>, transform_indices = @transform_2, window_bounds = array<i64: 1, 128>}, {pipeline_mode = #tpu.pipeline_mode<synchronous>, transform_indices = @transform_3, window_bounds = array<i64: 1, 128>}, {pipeline_mode = #tpu.pipeline_mode<synchronous>, transform_indices = @transform_4, window_bounds = array<i64: 1, 128>}, {transform_indices = @transform_5, window_bounds = array<i64: 8, 128>}]} {
    %c0 = arith.constant 0 : index
    %c0_0 = arith.constant 0 : index
    %0 = vector.load %arg1[%c0, %c0_0] : memref<8x128xf32, #tpu.memory_space<vmem>>, vector<8x128xf32>
    %c0_1 = arith.constant 0 : index
    %c0_2 = arith.constant 0 : index
    %1 = vector.load %arg2[%c0_1, %c0_2] : memref<128x128xf32, #tpu.memory_space<vmem>>, vector<128x128xf32>
    %cst = arith.constant dense<0.000000e+00> : vector<8x128xf32>
    %2 = tpu.matmul %0, %1, %cst {dimension_numbers = #tpu.dot_dimension_numbers<[1], [0], [0], [1], [0, 0, 1, 1], [], []>} : vector<8x128xf32>, vector<128x128xf32>, vector<8x128xf32> -> vector<8x128xf32>
    %c0_3 = arith.constant 0 : index
    %c0_4 = arith.constant 0 : index
    %3 = vector.load %arg3[%c0_3, %c0_4] : memref<1x128xf32, #tpu.memory_space<vmem>>, vector<1x128xf32>
    %4 = vector.broadcast %3 : vector<1x128xf32> to vector<8x128xf32>
    %5 = arith.addf %2, %4 : vector<8x128xf32>
    %cst_5 = arith.constant 0.000000e+00 : f32
    %6 = vector.broadcast %cst_5 : f32 to vector<8x128xf32>
    %7 = arith.maximumf %5, %6 : vector<8x128xf32>
    %8 = tpu.iota {dimensions = array<i32: 1>} : vector<1x128xi32>
    %c32_i32 = arith.constant 32 : i32
    %9 = vector.broadcast %c32_i32 : i32 to vector<1x128xi32>
    %10 = arith.cmpi slt, %8, %9 : vector<1x128xi32>
    %11 = arith.extui %10 : vector<1x128xi1> to vector<1x128xi32>
    %12 = arith.sitofp %11 : vector<1x128xi32> to vector<1x128xf32>
    %13 = vector.broadcast %12 : vector<1x128xf32> to vector<8x128xf32>
    %14 = arith.mulf %7, %13 : vector<8x128xf32>
    %cst_6 = arith.constant dense<0.000000e+00> : vector<8xf32>
    %15 = vector.multi_reduction <add>, %14, %cst_6 [1] : vector<8x128xf32> to vector<8xf32>
    %16 = vector.shape_cast %15 : vector<8xf32> to vector<8x1xf32>
    %cst_7 = arith.constant 3.125000e-02 : f32
    %17 = vector.broadcast %cst_7 : f32 to vector<8x1xf32>
    %18 = arith.mulf %16, %17 : vector<8x1xf32>
    %19 = vector.broadcast %18 : vector<8x1xf32> to vector<8x128xf32>
    %20 = arith.subf %7, %19 : vector<8x128xf32>
    %21 = arith.mulf %20, %20 : vector<8x128xf32>
    %22 = vector.broadcast %12 : vector<1x128xf32> to vector<8x128xf32>
    %23 = arith.mulf %21, %22 : vector<8x128xf32>
    %cst_8 = arith.constant dense<0.000000e+00> : vector<8xf32>
    %24 = vector.multi_reduction <add>, %23, %cst_8 [1] : vector<8x128xf32> to vector<8xf32>
    %25 = vector.shape_cast %24 : vector<8xf32> to vector<8x1xf32>
    %cst_9 = arith.constant 3.125000e-02 : f32
    %26 = vector.broadcast %cst_9 : f32 to vector<8x1xf32>
    %27 = arith.mulf %25, %26 : vector<8x1xf32>
    %cst_10 = arith.constant 9.99999974E-6 : f32
    %28 = vector.broadcast %cst_10 : f32 to vector<8x1xf32>
    %29 = arith.addf %27, %28 : vector<8x1xf32>
    %30 = math.rsqrt %29 : vector<8x1xf32>
    %31 = vector.broadcast %30 : vector<8x1xf32> to vector<8x128xf32>
    %32 = arith.mulf %20, %31 : vector<8x128xf32>
    %c0_11 = arith.constant 0 : index
    %c0_12 = arith.constant 0 : index
    %33 = vector.load %arg4[%c0_11, %c0_12] : memref<1x128xf32, #tpu.memory_space<vmem>>, vector<1x128xf32>
    %34 = vector.broadcast %33 : vector<1x128xf32> to vector<8x128xf32>
    %35 = arith.mulf %32, %34 : vector<8x128xf32>
    %c0_13 = arith.constant 0 : index
    %c0_14 = arith.constant 0 : index
    %36 = vector.load %arg5[%c0_13, %c0_14] : memref<1x128xf32, #tpu.memory_space<vmem>>, vector<1x128xf32>
    %37 = vector.broadcast %36 : vector<1x128xf32> to vector<8x128xf32>
    %38 = arith.addf %35, %37 : vector<8x128xf32>
    %c0_15 = arith.constant 0 : index
    %c0_16 = arith.constant 0 : index
    %39 = vector.load %arg6[%c0_15, %c0_16] : memref<8x128xf32, #tpu.memory_space<vmem>>, vector<8x128xf32>
    tpu.vector_store %arg6[%c0_15, %c0_16], %38 {strides = array<i32>} : memref<8x128xf32, #tpu.memory_space<vmem>>, vector<8x128xf32>,
    return
  }
  func.func @transform_0(%arg0: i32) -> (i32, i32) {
    %c0_i32 = arith.constant 0 : i32
    %c0_i32_0 = arith.constant 0 : i32
    return %arg0, %c0_i32 : i32, i32
  }
  func.func @transform_1(%arg0: i32) -> (i32, i32) {
    %c0_i32 = arith.constant 0 : i32
    %c0_i32_0 = arith.constant 0 : i32
    %c0_i32_1 = arith.constant 0 : i32
    return %c0_i32, %c0_i32_0 : i32, i32
  }
  func.func @transform_2(%arg0: i32) -> (i32, i32) {
    %c0_i32 = arith.constant 0 : i32
    %c0_i32_0 = arith.constant 0 : i32
    %c0_i32_1 = arith.constant 0 : i32
    return %c0_i32, %c0_i32_0 : i32, i32
  }
  func.func @transform_3(%arg0: i32) -> (i32, i32) {
    %c0_i32 = arith.constant 0 : i32
    %c0_i32_0 = arith.constant 0 : i32
    %c0_i32_1 = arith.constant 0 : i32
    return %c0_i32, %c0_i32_0 : i32, i32
  }
  func.func @transform_4(%arg0: i32) -> (i32, i32) {
    %c0_i32 = arith.constant 0 : i32
    %c0_i32_0 = arith.constant 0 : i32
    %c0_i32_1 = arith.constant 0 : i32
    return %c0_i32, %c0_i32_0 : i32, i32
  }
  func.func @transform_5(%arg0: i32) -> (i32, i32) {
    %c0_i32 = arith.constant 0 : i32
    %c0_i32_0 = arith.constant 0 : i32
    return %arg0, %c0_i32 : i32, i32
  }
}

</mosaic_0001>

<llo_original>
// kernel: tpu_custom_call.1
$region0: #{tpu_custom_call.1}
  #allocation0 [shape = 'u32[]', space=smem, size = 0x4, offset = 0x4, fixed_abs, tag = 'smem constant byte address 0x4 - core index']
  #allocation1 [shape = 'u32[144,128]{1,0:T(1,128)}', space=vmem, size = 0x12000, scoped, tag = 'internal scratch']
  %s0 = inlined_call_operand.hbm [shape: f32[8,128], index: 0, kind: input, shape index: {}]
  %s1 = inlined_call_operand.hbm [shape: f32[128,128], index: 1, kind: input, shape index: {}]
  %s2 = inlined_call_operand.vmem [shape: f32[1,128], index: 2, kind: input, shape index: {}]
  %s3 = inlined_call_operand.vmem [shape: f32[1,128], index: 3, kind: input, shape index: {}]
  %s4 = inlined_call_operand.vmem [shape: f32[1,128], index: 4, kind: input, shape index: {}]
  %s5 = inlined_call_operand.hbm [shape: f32[8,128], index: 5, kind: output, shape index: {}]
  %s6 = sld [smem:[#allocation0]]
  $region38: #{tpu_custom_call.1} parent=0
    _
  %s8 = ssub.s32 1, %s6
  %s9 = scalar_select 0, %s8, %s6
  $region1: #{tpu_custom_call.1} parent=0
    #allocation2 [shape = 'u8[4096]{0}', space=vmem, size = 0x1000, scoped, tag = 'input window, operand 0, single buffered']
    #allocation3 [shape = 's32[1]{0}', space=sflag, size = 0x4, scoped, tag = 'scoped memory for tpu_custom_call.1']
    #allocation4 [shape = 's32[1]{0}', space=sflag, size = 0x4, scoped, tag = 'scoped memory for tpu_custom_call.1']
    #allocation5 [shape = 'u8[65536]{0}', space=vmem, size = 0x10000, scoped, tag = 'input window, operand 1, single buffered']
    #allocation6 [shape = 's32[1]{0}', space=sflag, size = 0x4, scoped, tag = 'scoped memory for tpu_custom_call.1']
    #allocation7 [shape = 'u8[4096]{0}', space=vmem, size = 0x1000, scoped, tag = 'output window, operand 0, single buffered']
    %10 = vsyncpa [#allocation3], 0
    %11 = vsyncpa [#allocation6], 0
    %12 = vsyncpa [#allocation4], 0
    // Predicated region
    $region2: #{tpu_custom_call.1} parent=1 // pred_check
      _
    $region3: #{tpu_custom_call.1} parent=1 // pred_check_branch
      %14 = sbr.rel (0) target = $region5
    $region4: #{tpu_custom_call.1} parent=1 // pred_region
      %s16 = ssub.s32 128, 128
      %17 = vsyncadd [#allocation3], %s16
      %s19 = sshll.u32 [#allocation2], 4
      %s20 = int_to_ptr.vmem [resolvable:$true] %s19
      %22 = dma.hbm_to_vmem [thread:$0]  %s0, 128, %s20, [#allocation3]
    $region5: #{tpu_custom_call.1} parent=1 // pred_fallthru
      _
    // Predicated region
    $region6: #{tpu_custom_call.1} parent=1 // pred_check
      _
    $region7: #{tpu_custom_call.1} parent=1 // pred_check_branch
      %24 = sbr.rel (0) target = $region9
    $region8: #{tpu_custom_call.1} parent=1 // pred_region
      %s26 = ssub.s32 2048, 2048
      %27 = vsyncadd [#allocation6], %s26
      %s28 = sshll.u32 [#allocation5], 4
      %s29 = int_to_ptr.vmem [resolvable:$true] %s28
      %34 = dma.hbm_to_vmem [thread:$0]  %s1, 2048, %s29, [#allocation6], 128, 128, 8
    $region9: #{tpu_custom_call.1} parent=1 // pred_fallthru
      _
    // Predicated region
    $region10: #{tpu_custom_call.1} parent=1 // pred_check
      _
    $region11: #{tpu_custom_call.1} parent=1 // pred_check_branch
      %36 = sbr.rel (0) target = $region13
    $region12: #{tpu_custom_call.1} parent=1 // pred_region
      _
    $region13: #{tpu_custom_call.1} parent=1 // pred_fallthru
      _
    // Predicated region
    $region14: #{tpu_custom_call.1} parent=1 // pred_check
      _
    $region15: #{tpu_custom_call.1} parent=1 // pred_check_branch
      %38 = sbr.rel (0) target = $region17
    $region16: #{tpu_custom_call.1} parent=1 // pred_region
      _
    $region17: #{tpu_custom_call.1} parent=1 // pred_fallthru
      _
    // Predicated region
    $region18: #{tpu_custom_call.1} parent=1 // pred_check
      _
    $region19: #{tpu_custom_call.1} parent=1 // pred_check_branch
      %40 = sbr.rel (0) target = $region21
    $region20: #{tpu_custom_call.1} parent=1 // pred_region
      _
    $region21: #{tpu_custom_call.1} parent=1 // pred_fallthru
      _
    // Predicated region
    $region22: #{tpu_custom_call.1} parent=1 // pred_check
      _
    $region23: #{tpu_custom_call.1} parent=1 // pred_check_branch
      %42 = sbr.rel (0) target = $region25
    $region24: #{tpu_custom_call.1} parent=1 // pred_region
      %43 = dma.done [#allocation3], 128
    $region25: #{tpu_custom_call.1} parent=1 // pred_fallthru
      _
    // Predicated region
    $region26: #{tpu_custom_call.1} parent=1 // pred_check
      _
    $region27: #{tpu_custom_call.1} parent=1 // pred_check_branch
      %45 = sbr.rel (0) target = $region29
    $region28: #{tpu_custom_call.1} parent=1 // pred_region
      %46 = dma.done [#allocation6], 2048
    $region29: #{tpu_custom_call.1} parent=1 // pred_fallthru
      _
    %v47 = vld [vmem:[#allocation2] sm:$0xff]
    %v48 = vld [vmem:[#allocation5] sm:$0xff]
    %v49 = vld [vmem:[#allocation5 + $0x8] sm:$0xff]
    %v50 = vld [vmem:[#allocation5 + $0x10] sm:$0xff]
    %v51 = vld [vmem:[#allocation5 + $0x18] sm:$0xff]
    %v52 = vld [vmem:[#allocation5 + $0x20] sm:$0xff]
    %v53 = vld [vmem:[#allocation5 + $0x28] sm:$0xff]
    %v54 = vld [vmem:[#allocation5 + $0x30] sm:$0xff]
    %v55 = vld [vmem:[#allocation5 + $0x38] sm:$0xff]
    %v56 = vld [vmem:[#allocation5 + $0x40] sm:$0xff]
    %v57 = vld [vmem:[#allocation5 + $0x48] sm:$0xff]
    %v58 = vld [vmem:[#allocation5 + $0x50] sm:$0xff]
    %v59 = vld [vmem:[#allocation5 + $0x58] sm:$0xff]
    %v60 = vld [vmem:[#allocation5 + $0x60] sm:$0xff]
    %v61 = vld [vmem:[#allocation5 + $0x68] sm:$0xff]
    %v62 = vld [vmem:[#allocation5 + $0x70] sm:$0xff]
    %v63 = vld [vmem:[#allocation5 + $0x78] sm:$0xff]
    %v64 = vld [vmem:[%s2] sm:$0x1]
    %v66 = vlaneseq
    %v67 = vshrl.u32 %v66, 7
    %v68 = vsub.s32 0, %v67
    %v69 = vrot.slane %v64, %v68
    %71 = vmatprep.subr.mxu0 0.0
    %72 = vmatpush1.msra.mxu0 %v63
    %73 = vmatprep.subr.mxu0 0.0
    %74 = vmatpush1.msra.mxu0 %v62
    %75 = vmatprep.subr.mxu0 0.0
    %76 = vmatpush1.msra.mxu0 %v61
    %77 = vmatprep.subr.mxu0 0.0
    %78 = vmatpush1.msra.mxu0 %v60
    %79 = vmatprep.subr.mxu0 0.0
    %80 = vmatpush1.msra.mxu0 %v59
    %81 = vmatprep.subr.mxu0 0.0
    %82 = vmatpush1.msra.mxu0 %v58
    %83 = vmatprep.subr.mxu0 0.0
    %84 = vmatpush1.msra.mxu0 %v57
    %85 = vmatprep.subr.mxu0 0.0
    %86 = vmatpush1.msra.mxu0 %v56
    %87 = vmatprep.subr.mxu0 0.0
    %88 = vmatpush1.msra.mxu0 %v55
    %89 = vmatprep.subr.mxu0 0.0
    %90 = vmatpush1.msra.mxu0 %v54
    %91 = vmatprep.subr.mxu0 0.0
    %92 = vmatpush1.msra.mxu0 %v53
    %93 = vmatprep.subr.mxu0 0.0
    %94 = vmatpush1.msra.mxu0 %v52
    %95 = vmatprep.subr.mxu0 0.0
    %96 = vmatpush1.msra.mxu0 %v51
    %97 = vmatprep.subr.mxu0 0.0
    %98 = vmatpush1.msra.mxu0 %v50
    %99 = vmatprep.subr.mxu0 0.0
    %100 = vmatpush1.msra.mxu0 %v49
    %101 = vmatprep.subr.mxu0 0.0
    %102 = vmatpush1.msra.mxu0 %v48
    %103 = vmatprep.subr.mxu0 0.0
    %104 = vmatpush2.msra.mxu0 0.0
    %105 = vmatprep.subr.mxu0 0.0
    %106 = vmatpush2.msra.mxu0 0.0
    %107 = vmatprep.subr.mxu0 0.0
    %108 = vmatpush2.msra.mxu0 0.0
    %109 = vmatprep.subr.mxu0 0.0
    %110 = vmatpush2.msra.mxu0 0.0
    %111 = vmatprep.subr.mxu0 0.0
    %112 = vmatpush2.msra.mxu0 0.0
    %113 = vmatprep.subr.mxu0 0.0
    %114 = vmatpush2.msra.mxu0 0.0
    %115 = vmatprep.subr.mxu0 0.0
    %116 = vmatpush2.msra.mxu0 0.0
    %117 = vmatprep.subr.mxu0 0.0
    %118 = vmatpush2.msra.mxu0 0.0
    %119 = vmatprep.subr.mxu0 0.0
    %120 = vmatpush2.msra.mxu0 0.0
    %121 = vmatprep.subr.mxu0 0.0
    %122 = vmatpush2.msra.mxu0 0.0
    %123 = vmatprep.subr.mxu0 0.0
    %124 = vmatpush2.msra.mxu0 0.0
    %125 = vmatprep.subr.mxu0 0.0
    %126 = vmatpush2.msra.mxu0 0.0
    %127 = vmatprep.subr.mxu0 0.0
    %128 = vmatpush2.msra.mxu0 0.0
    %129 = vmatprep.subr.mxu0 0.0
    %130 = vmatpush2.msra.mxu0 0.0
    %131 = vmatprep.subr.mxu0 0.0
    %132 = vmatpush2.msra.mxu0 0.0
    %133 = vmatprep.subr.mxu0 0.0
    %134 = vmatpush2.msra.mxu0 0.0
    %135 = vmatprep.mubr.f32.mxu0 0.0
    %136 = vmatmul.mubr.f32.gmra.mxu0 %v47
    %v137 = vpop.f32.mrf.mxu0
    %v138 = vadd.f32 %v69, %v137
    %v139 = vpop.f32.mrf.mxu0
    %140 = vdwg.mxu0
    %v141 = vmax.f32 %v138, 0.0
    %v142 = vlaneseq
    %v143 = vand.u32 %v142, 127
    %vm144 = vcmp.lt.s32.totalorder %v143, 32
    %v145 = vsel %vm144, 1, 0
    %v146 = vcvt.s32.f32 %v145
    %v147 = vmul.f32 %v141, %v146
    %148 = vadd.xlane.f32.xlu0 %v147
    %v149 = vpop.xlane.xlu0 %148
    %v150 = vmul.f32 %v149, 0.03125
    %v151 = vsub.f32 %v141, %v150
    %v152 = vmul.f32 %v151, %v151
    %v153 = vmul.f32 %v152, %v146
    %154 = vadd.xlane.f32.xlu0 %v153
    %v155 = vpop.xlane.xlu0 %154
    %v156 = vmul.f32 %v155, 0.03125
    %v157 = vadd.f32 %v156, 1e-05
    %v158 = vrsqrt.pop %v157
    %v159 = vmul.f32 %v151, %v158
    %v160 = vld [vmem:[%s3] sm:$0x1]
    %v162 = vlaneseq
    %v163 = vshrl.u32 %v162, 7
    %v164 = vsub.s32 0, %v163
    %v165 = vrot.slane %v160, %v164
    %v167 = vmul.f32 %v159, %v165
    %v168 = vld [vmem:[%s4] sm:$0x1]
    %v170 = vlaneseq
    %v171 = vshrl.u32 %v170, 7
    %v172 = vsub.s32 0, %v171
    %v173 = vrot.slane %v168, %v172
    %v175 = vadd.f32 %v167, %v173
    %176 = vst [vmem:[#allocation7] sm:$0xff] %v175
    // Predicated region
    $region30: #{tpu_custom_call.1} parent=1 // pred_check
      _
    $region31: #{tpu_custom_call.1} parent=1 // pred_check_branch
      %178 = sbr.rel (0) target = $region33
    $region32: #{tpu_custom_call.1} parent=1 // pred_region
      %s180 = ssub.s32 128, 128
      %181 = vsyncadd [#allocation4], %s180
      %s183 = sshll.u32 [#allocation7], 4
      %s184 = int_to_ptr.vmem [resolvable:$true] %s183
      %186 = dma.vmem_to_hbm [thread:$0]  %s184, 128, %s5, [#allocation4]
    $region33: #{tpu_custom_call.1} parent=1 // pred_fallthru
      _
    // Predicated region
    $region34: #{tpu_custom_call.1} parent=1 // pred_check
      _
    $region35: #{tpu_custom_call.1} parent=1 // pred_check_branch
      %188 = sbr.rel (0) target = $region37
    $region36: #{tpu_custom_call.1} parent=1 // pred_region
      %189 = dma.done [#allocation4], 128
    $region37: #{tpu_custom_call.1} parent=1 // pred_fallthru
      _
    %190 = vsyncpa [#allocation3], 1
    %191 = vsyncpa [#allocation6], 1
    %192 = vsyncpa [#allocation4], 1

</llo_original>
